<compile_context>
chip_gen: v7x
topology: tpu7x:2x2x1
jax: 0.10.0
libtpu: 0.0.40
codegen_flags: <defaults>
</compile_context>

<pallas_src>
import jax
import jax.numpy as jnp
from jax.experimental import pallas as pl
from jax.experimental.pallas import tpu as pltpu


def _round_up(x, m):
    return ((x + m - 1) // m) * m


def _linear_kernel(x_ref, w_ref, b_ref, o_ref):
    # x_ref: (TM, Fp) row tile, w_ref: (Fp, Hp) VMEM-resident, b_ref: (1, Hp) f32, o_ref: (TM, Hp)
    acc = jnp.dot(x_ref[...], w_ref[...], preferred_element_type=jnp.float32)
    o_ref[...] = (acc + b_ref[...]).astype(o_ref.dtype)


def _linear_ktiled_kernel(x_ref, w_ref, b_ref, o_ref, acc_ref):
    # x_ref: (TM, TK), w_ref: (TK, Hp), b_ref: (1, Hp) f32, o_ref: (TM, Hp), acc_ref: (TM, Hp) f32
    k = pl.program_id(1)

    @pl.when(k == 0)
    def _():
        acc_ref[...] = jnp.zeros_like(acc_ref)

    acc_ref[...] += jnp.dot(x_ref[...], w_ref[...], preferred_element_type=jnp.float32)

    @pl.when(k == pl.num_programs(1) - 1)
    def _():
        o_ref[...] = (acc_ref[...] + b_ref[...]).astype(o_ref.dtype)


def _choose_tiles(n_rows, f_pad, h_pad, in_itemsize, out_itemsize, sublane,
                  vmem_budget_bytes, force_tk=None):
    """Pick (row tile, K tile, num_k, padded F) under a VMEM budget."""
    # 1) Reduction tile: keep the whole weight VMEM-resident when it comfortably fits,
    #    otherwise split F into 128-multiple chunks so the (double-buffered) weight tile
    #    uses at most ~half the budget.
    if force_tk is not None:
        tk = min(_round_up(force_tk, 128), f_pad)
    elif f_pad * h_pad * in_itemsize <= vmem_budget_bytes // 2:
        tk = f_pad
    else:
        tk = (vmem_budget_bytes // 2) // (2 * h_pad * in_itemsize)
        tk = max(128, (tk // 128) * 128)
        tk = min(tk, f_pad)
    f_pad2 = _round_up(f_pad, tk)
    num_k = f_pad2 // tk

    # 2) Row tile: largest power-of-two tile whose buffers fit the budget.
    if num_k == 1:
        fixed = tk * h_pad * in_itemsize + 2 * h_pad * 4            # resident W + bias
        per_row = 2 * tk * in_itemsize + 2 * h_pad * out_itemsize   # x + y, double-buffered
    else:
        fixed = 2 * tk * h_pad * in_itemsize + 2 * h_pad * 4        # double-buffered W tile + bias
        per_row = (2 * tk * in_itemsize + 2 * h_pad * out_itemsize
                   + h_pad * 4)                                     # + f32 accumulator scratch
    tm = 1024
    while tm > sublane and fixed + tm * per_row > vmem_budget_bytes:
        tm //= 2
    tm = max(sublane, tm)
    # No point tiling beyond the (sublane-rounded) row count.
    tm = min(tm, _round_up(n_rows, sublane))
    tm = _round_up(tm, sublane)
    return tm, tk, num_k, f_pad2


def _pallas_linear(x2d, weight, bias2d, *, compute_dtype=None,
                   vmem_budget_bytes=40 * 1024 * 1024, force_tk=None):
    """y = x2d @ weight + bias.  x2d: (N, F), weight: (F, H), bias2d: (1, H) -> (N, H)."""
    N, F = x2d.shape
    Fw, H = weight.shape
    assert Fw == F, (Fw, F)
    out_dtype = x2d.dtype

    if compute_dtype is not None:
        x2d = x2d.astype(compute_dtype)
        weight = weight.astype(compute_dtype)
    in_itemsize = jnp.dtype(x2d.dtype).itemsize
    out_itemsize = jnp.dtype(out_dtype).itemsize
    sublane = 8 if in_itemsize >= 4 else (16 if in_itemsize == 2 else 32)

    # Lane-pad F and H to multiples of 128: (8,128)-legal tiles, unmasked output stores.
    F_pad = _round_up(F, 128)
    H_pad = _round_up(H, 128)

    tm, tk, num_k, F_pad = _choose_tiles(
        N, F_pad, H_pad, in_itemsize, out_itemsize, sublane,
        vmem_budget_bytes, force_tk=force_tk)
    N_pad = _round_up(N, tm)

    x_p = x2d
    if (N_pad != N) or (F_pad != F):
        x_p = jnp.pad(x2d, ((0, N_pad - N), (0, F_pad - F)))
    w_p = weight
    if (F_pad != F) or (H_pad != H):
        w_p = jnp.pad(weight, ((0, F_pad - F), (0, H_pad - H)))
    b_p = bias2d.astype(jnp.float32)
    if H_pad != H:
        b_p = jnp.pad(b_p, ((0, 0), (0, H_pad - H)))

    cost = pl.CostEstimate(
        flops=2 * N_pad * F_pad * H_pad,
        transcendentals=0,
        bytes_accessed=(N_pad * F_pad + F_pad * H_pad) * in_itemsize
        + N_pad * H_pad * out_itemsize,
    )

    if num_k == 1:
        # Weight fully VMEM-resident; only row tiles stream through the pipeline.
        kernel = _linear_kernel
        grid = (N_pad // tm,)
        in_specs = [
            pl.BlockSpec((tm, F_pad), lambda i: (i, 0)),      # row tile of x
            pl.BlockSpec((F_pad, H_pad), lambda i: (0, 0)),   # weight, VMEM-resident
            pl.BlockSpec((1, H_pad), lambda i: (0, 0)),       # bias, VMEM-resident
        ]
        out_specs = pl.BlockSpec((tm, H_pad), lambda i: (i, 0))
        scratch = []
        dim_sem = ("parallel",)
    else:
        # Split the reduction (F) axis; accumulate in an f32 VMEM scratch.
        kernel = _linear_ktiled_kernel
        grid = (N_pad // tm, num_k)
        in_specs = [
            pl.BlockSpec((tm, tk), lambda i, k: (i, k)),       # x K-chunk
            pl.BlockSpec((tk, H_pad), lambda i, k: (k, 0)),    # weight K-chunk
            pl.BlockSpec((1, H_pad), lambda i, k: (0, 0)),     # bias
        ]
        out_specs = pl.BlockSpec((tm, H_pad), lambda i, k: (i, 0))
        scratch = [pltpu.VMEM((tm, H_pad), jnp.float32)]
        dim_sem = ("parallel", "arbitrary")

    y = pl.pallas_call(
        kernel,
        out_shape=jax.ShapeDtypeStruct((N_pad, H_pad), out_dtype),
        grid_spec=pltpu.PrefetchScalarGridSpec(
            num_scalar_prefetch=0,
            grid=grid,
            in_specs=in_specs,
            out_specs=out_specs,
            scratch_shapes=scratch,
        ),
        compiler_params=pltpu.CompilerParams(
            # Row tiles are independent -> shard across TensorCores (2 TCs on v7x).
            dimension_semantics=dim_sem,
            # Allow tiles larger than the scoped default (16/32 MiB) while staying
            # under the smallest physical VMEM (64 MiB on v7x).
            vmem_limit_bytes=64 * 1024 * 1024,
        ),
        cost_estimate=cost,
    )(x_p, w_p, b_p)

    if (N_pad != N) or (H_pad != H):
        y = y[:N, :H]
    return y


class TimeDistributedLinear:
    """JAX/Pallas equivalent of TimeDistributed(nn.Linear(in_f, out_f), batch_first, return_reshaped)."""

    def __init__(self, weight, bias, batch_first=True, return_reshaped=True, compute_dtype=None):
        # weight: (in_features, out_features)  [transposed vs torch's (out, in)]
        # bias:   (out_features,)
        # compute_dtype: e.g. jnp.bfloat16 to halve HBM traffic on v6e/v7x (f32 accumulation).
        self.weight = weight
        self.bias = bias.reshape(1, -1)
        self.batch_first = batch_first
        self.return_reshaped = return_reshaped
        self.compute_dtype = compute_dtype

    def _linear(self, x2d):
        return _pallas_linear(x2d, self.weight, self.bias, compute_dtype=self.compute_dtype)

    def __call__(self, x):
        # NOTE: at tiny sizes (like the demo) a plain `x @ w + b` fused by XLA would be
        # faster than a pallas_call; the Pallas path is kept here to exercise the kernel.
        if x.ndim <= 2:
            if x.ndim == 1:
                # nn.Linear accepts 1-D input and returns 1-D output.
                return self._linear(x.reshape(1, -1)).reshape(-1)
            return self._linear(x)
        # x.contiguous().view(-1, x.size(-1))
        x_reshape = x.reshape(-1, x.shape[-1])
        y = self._linear(x_reshape)
        if self.return_reshaped:
            if self.batch_first:
                y = y.reshape(x.shape[0], -1, y.shape[-1])
            else:
                y = y.reshape(-1, x.shape[1], y.shape[-1])
        return y


if __name__ == "__main__":
    key = jax.random.PRNGKey(0)
    k_x, k_w, k_b = jax.random.split(key, 3)

    batch, seq, in_features, out_features = 2, 8, 32, 32

    # Deterministic synthetic parameters (no checkpoint load).
    weight = jax.random.normal(k_w, (in_features, out_features), jnp.float32) * 0.1
    bias = jax.random.normal(k_b, (out_features,), jnp.float32) * 0.1
    x = jax.random.normal(k_x, (batch, seq, in_features), jnp.float32)

    td = TimeDistributedLinear(weight, bias, batch_first=True, return_reshaped=True)
    y = jax.block_until_ready(td(x))

    # Reference in plain JAX.
    y_ref = (x.reshape(-1, in_features) @ weight + bias).reshape(batch, -1, out_features)
    assert y.shape == (batch, seq, out_features), y.shape
    # MXU default precision for f32 operands uses bf16 passes -> allow ~1e-3.
    assert jnp.allclose(y, y_ref, atol=2e-3, rtol=2e-3), float(jnp.max(jnp.abs(y - y_ref)))

    # 2-D branch: module applied directly, no reshape.
    y2d = jax.block_until_ready(td(x[0]))
    assert y2d.shape == (seq, out_features), y2d.shape
    assert jnp.allclose(y2d, x[0] @ weight + bias, atol=2e-3, rtol=2e-3)

    # 1-D branch: nn.Linear on a single feature vector.
    y1d = jax.block_until_ready(td(x[0, 0]))
    assert y1d.shape == (out_features,), y1d.shape
    assert jnp.allclose(y1d, x[0, 0] @ weight + bias, atol=2e-3, rtol=2e-3)

    # Optional bf16 compute path (halves HBM traffic, matches bf16 MXU on v6e/v7x).
    td_bf16 = TimeDistributedLinear(weight, bias, compute_dtype=jnp.bfloat16)
    y_bf16 = jax.block_until_ready(td_bf16(x))
    assert y_bf16.shape == (batch, seq, out_features), y_bf16.shape
    assert jnp.allclose(y_bf16, y_ref, atol=1e-1, rtol=1e-1)

    # Exercise the K-tiled (split-reduction) path on small shapes by forcing tk=128.
    k2_x, k2_w, k2_b = jax.random.split(jax.random.PRNGKey(1), 3)
    F_big = 256
    w_big = jax.random.normal(k2_w, (F_big, out_features), jnp.float32) * 0.05
    b_big = jax.random.normal(k2_b, (out_features,), jnp.float32) * 0.05
    x_big = jax.random.normal(k2_x, (batch * seq, F_big), jnp.float32)
    y_k = jax.block_until_ready(
        _pallas_linear(x_big, w_big, b_big.reshape(1, -1), force_tk=128))
    y_k_ref = x_big @ w_big + b_big
    assert y_k.shape == (batch * seq, out_features), y_k.shape
    assert jnp.allclose(y_k, y_k_ref, atol=1e-2, rtol=1e-2), float(jnp.max(jnp.abs(y_k - y_k_ref)))

    print("KERNEL_OK")
</pallas_src>

<mosaic_0001>
module attributes {stable_mosaic.version = 11 : i64} {
  func.func @_linear_kernel(%arg0: i32, %arg1: memref<16x128xf32, #tpu.memory_space<vmem>>, %arg2: memref<128x128xf32, #tpu.memory_space<vmem>>, %arg3: memref<1x128xf32, #tpu.memory_space<vmem>>, %arg4: memref<16x128xf32, #tpu.memory_space<vmem>>) attributes {dimension_semantics = [#tpu.dimension_semantics<parallel>], iteration_bounds = array<i64: 1>, scalar_prefetch = 0 : i64, scratch_operands = 0 : i64, tpu.core_type = #tpu.core_type<tc>, window_params = [{transform_indices = @transform_0, window_bounds = array<i64: 16, 128>}, {pipeline_mode = #tpu.pipeline_mode<synchronous>, transform_indices = @transform_1, window_bounds = array<i64: 128, 128>}, {pipeline_mode = #tpu.pipeline_mode<synchronous>, transform_indices = @transform_2, window_bounds = array<i64: 1, 128>}, {transform_indices = @transform_3, window_bounds = array<i64: 16, 128>}]} {
    %c0 = arith.constant 0 : index
    %c0_0 = arith.constant 0 : index
    %0 = vector.load %arg1[%c0, %c0_0] : memref<16x128xf32, #tpu.memory_space<vmem>>, vector<16x128xf32>
    %c0_1 = arith.constant 0 : index
    %c0_2 = arith.constant 0 : index
    %1 = vector.load %arg2[%c0_1, %c0_2] : memref<128x128xf32, #tpu.memory_space<vmem>>, vector<128x128xf32>
    %cst = arith.constant dense<0.000000e+00> : vector<16x128xf32>
    %2 = tpu.matmul %0, %1, %cst {dimension_numbers = #tpu.dot_dimension_numbers<[1], [0], [0], [1], [0, 0, 1, 1], [], []>} : vector<16x128xf32>, vector<128x128xf32>, vector<16x128xf32> -> vector<16x128xf32>
    %c0_3 = arith.constant 0 : index
    %c0_4 = arith.constant 0 : index
    %3 = vector.load %arg3[%c0_3, %c0_4] : memref<1x128xf32, #tpu.memory_space<vmem>>, vector<1x128xf32>
    %4 = vector.broadcast %3 : vector<1x128xf32> to vector<16x128xf32>
    %5 = arith.addf %2, %4 : vector<16x128xf32>
    %c0_5 = arith.constant 0 : index
    %c0_6 = arith.constant 0 : index
    %6 = vector.load %arg4[%c0_5, %c0_6] : memref<16x128xf32, #tpu.memory_space<vmem>>, vector<16x128xf32>
    tpu.vector_store %arg4[%c0_5, %c0_6], %5 {strides = array<i32>} : memref<16x128xf32, #tpu.memory_space<vmem>>, vector<16x128xf32>,
    return
  }
  func.func @transform_0(%arg0: i32) -> (i32, i32) {
    %c0_i32 = arith.constant 0 : i32
    %c0_i32_0 = arith.constant 0 : i32
    return %arg0, %c0_i32 : i32, i32
  }
  func.func @transform_1(%arg0: i32) -> (i32, i32) {
    %c0_i32 = arith.constant 0 : i32
    %c0_i32_0 = arith.constant 0 : i32
    %c0_i32_1 = arith.constant 0 : i32
    return %c0_i32, %c0_i32_0 : i32, i32
  }
  func.func @transform_2(%arg0: i32) -> (i32, i32) {
    %c0_i32 = arith.constant 0 : i32
    %c0_i32_0 = arith.constant 0 : i32
    %c0_i32_1 = arith.constant 0 : i32
    return %c0_i32, %c0_i32_0 : i32, i32
  }
  func.func @transform_3(%arg0: i32) -> (i32, i32) {
    %c0_i32 = arith.constant 0 : i32
    %c0_i32_0 = arith.constant 0 : i32
    return %arg0, %c0_i32 : i32, i32
  }
}

</mosaic_0001>

<llo_original>
// kernel: tpu_custom_call.1
$region0: #{tpu_custom_call.1}
  #allocation0 [shape = 'u32[]', space=smem, size = 0x4, offset = 0x4, fixed_abs, tag = 'smem constant byte address 0x4 - core index']
  #allocation1 [shape = 'u32[144,128]{1,0:T(1,128)}', space=vmem, size = 0x12000, scoped, tag = 'internal scratch']
  %s0 = inlined_call_operand.hbm [shape: f32[16,128], index: 0, kind: input, shape index: {}]
  %s1 = inlined_call_operand.hbm [shape: f32[128,128], index: 1, kind: input, shape index: {}]
  %s2 = inlined_call_operand.hbm [shape: f32[1,128], index: 2, kind: input, shape index: {}]
  %s3 = inlined_call_operand.hbm [shape: f32[16,128], index: 3, kind: output, shape index: {}]
  %s4 = sld [smem:[#allocation0]]
  $region34: #{tpu_custom_call.1} parent=0
    _
  %s6 = ssub.s32 1, %s4
  %s7 = scalar_select 0, %s6, %s4
  $region1: #{tpu_custom_call.1} parent=0
    #allocation2 [shape = 'u8[8192]{0}', space=vmem, size = 0x2000, scoped, tag = 'input window, operand 0, single buffered']
    #allocation3 [shape = 's32[1]{0}', space=sflag, size = 0x4, scoped, tag = 'scoped memory for tpu_custom_call.1']
    #allocation4 [shape = 's32[1]{0}', space=sflag, size = 0x4, scoped, tag = 'scoped memory for tpu_custom_call.1']
    #allocation5 [shape = 'u8[65536]{0}', space=vmem, size = 0x10000, scoped, tag = 'input window, operand 1, single buffered']
    #allocation6 [shape = 's32[1]{0}', space=sflag, size = 0x4, scoped, tag = 'scoped memory for tpu_custom_call.1']
    #allocation7 [shape = 'u8[512]{0}', space=vmem, size = 0x400, scoped, tag = 'input window, operand 2, single buffered']
    #allocation8 [shape = 'u8[8192]{0}', space=vmem, size = 0x2000, scoped, tag = 'output window, operand 0, single buffered']
    %8 = vsyncpa [#allocation3], 0
    %9 = vsyncpa [#allocation6], 0
    %10 = vsyncpa [#allocation4], 0
    // Predicated region
    $region2: #{tpu_custom_call.1} parent=1 // pred_check
      _
    $region3: #{tpu_custom_call.1} parent=1 // pred_check_branch
      %12 = sbr.rel (0) target = $region5
    $region4: #{tpu_custom_call.1} parent=1 // pred_region
      %s14 = ssub.s32 256, 256
      %15 = vsyncadd [#allocation3], %s14
      %s16 = sshll.u32 [#allocation2], 4
      %s17 = int_to_ptr.vmem [resolvable:$true] %s16
      %22 = dma.hbm_to_vmem [thread:$0]  %s0, 256, %s17, [#allocation3], 128, 128, 8
    $region5: #{tpu_custom_call.1} parent=1 // pred_fallthru
      _
    // Predicated region
    $region6: #{tpu_custom_call.1} parent=1 // pred_check
      _
    $region7: #{tpu_custom_call.1} parent=1 // pred_check_branch
      %24 = sbr.rel (0) target = $region9
    $region8: #{tpu_custom_call.1} parent=1 // pred_region
      %s26 = ssub.s32 2048, 2048
      %27 = vsyncadd [#allocation6], %s26
      %s28 = sshll.u32 [#allocation5], 4
      %s29 = int_to_ptr.vmem [resolvable:$true] %s28
      %34 = dma.hbm_to_vmem [thread:$0]  %s1, 2048, %s29, [#allocation6], 128, 128, 8
    $region9: #{tpu_custom_call.1} parent=1 // pred_fallthru
      _
    // Predicated region
    $region10: #{tpu_custom_call.1} parent=1 // pred_check
      _
    $region11: #{tpu_custom_call.1} parent=1 // pred_check_branch
      %36 = sbr.rel (0) target = $region13
    $region12: #{tpu_custom_call.1} parent=1 // pred_region
      %s38 = ssub.s32 16, 16
      %39 = vsyncadd [#allocation6], %s38
      %s41 = sshll.u32 [#allocation7], 4
      %s42 = int_to_ptr.vmem [resolvable:$true] %s41
      %44 = dma.hbm_to_vmem [thread:$0]  %s2, 16, %s42, [#allocation6]
    $region13: #{tpu_custom_call.1} parent=1 // pred_fallthru
      _
    // Predicated region
    $region14: #{tpu_custom_call.1} parent=1 // pred_check
      _
    $region15: #{tpu_custom_call.1} parent=1 // pred_check_branch
      %46 = sbr.rel (0) target = $region17
    $region16: #{tpu_custom_call.1} parent=1 // pred_region
      %47 = dma.done [#allocation3], 256
    $region17: #{tpu_custom_call.1} parent=1 // pred_fallthru
      _
    // Predicated region
    $region18: #{tpu_custom_call.1} parent=1 // pred_check
      _
    $region19: #{tpu_custom_call.1} parent=1 // pred_check_branch
      %49 = sbr.rel (0) target = $region21
    $region20: #{tpu_custom_call.1} parent=1 // pred_region
      %50 = dma.done [#allocation6], 2048
    $region21: #{tpu_custom_call.1} parent=1 // pred_fallthru
      _
    // Predicated region
    $region22: #{tpu_custom_call.1} parent=1 // pred_check
      _
    $region23: #{tpu_custom_call.1} parent=1 // pred_check_branch
      %52 = sbr.rel (0) target = $region25
    $region24: #{tpu_custom_call.1} parent=1 // pred_region
      %53 = dma.done [#allocation6], 16
    $region25: #{tpu_custom_call.1} parent=1 // pred_fallthru
      _
    %v54 = vld [vmem:[#allocation2] sm:$0xff]
    %v55 = vld [vmem:[#allocation2 + $0x8] sm:$0xff]
    %v56 = vld [vmem:[#allocation5] sm:$0xff]
    %v57 = vld [vmem:[#allocation5 + $0x8] sm:$0xff]
    %v58 = vld [vmem:[#allocation5 + $0x10] sm:$0xff]
    %v59 = vld [vmem:[#allocation5 + $0x18] sm:$0xff]
    %v60 = vld [vmem:[#allocation5 + $0x20] sm:$0xff]
    %v61 = vld [vmem:[#allocation5 + $0x28] sm:$0xff]
    %v62 = vld [vmem:[#allocation5 + $0x30] sm:$0xff]
    %v63 = vld [vmem:[#allocation5 + $0x38] sm:$0xff]
    %v64 = vld [vmem:[#allocation5 + $0x40] sm:$0xff]
    %v65 = vld [vmem:[#allocation5 + $0x48] sm:$0xff]
    %v66 = vld [vmem:[#allocation5 + $0x50] sm:$0xff]
    %v67 = vld [vmem:[#allocation5 + $0x58] sm:$0xff]
    %v68 = vld [vmem:[#allocation5 + $0x60] sm:$0xff]
    %v69 = vld [vmem:[#allocation5 + $0x68] sm:$0xff]
    %v70 = vld [vmem:[#allocation5 + $0x70] sm:$0xff]
    %v71 = vld [vmem:[#allocation5 + $0x78] sm:$0xff]
    %v72 = vld [vmem:[#allocation7] sm:$0x1]
    %v74 = vlaneseq
    %v75 = vshrl.u32 %v74, 7
    %v76 = vsub.s32 0, %v75
    %v77 = vrot.slane %v72, %v76
    %79 = vmatprep.subr.mxu0 0.0
    %80 = vmatpush1.msra.mxu0 %v56
    %81 = vmatprep.subr.mxu0 0.0
    %82 = vmatpush1.msra.mxu0 %v57
    %83 = vmatprep.subr.mxu0 0.0
    %84 = vmatpush1.msra.mxu0 %v58
    %85 = vmatprep.subr.mxu0 0.0
    %86 = vmatpush1.msra.mxu0 %v59
    %87 = vmatprep.subr.mxu0 0.0
    %88 = vmatpush1.msra.mxu0 %v60
    %89 = vmatprep.subr.mxu0 0.0
    %90 = vmatpush1.msra.mxu0 %v61
    %91 = vmatprep.subr.mxu0 0.0
    %92 = vmatpush1.msra.mxu0 %v62
    %93 = vmatprep.subr.mxu0 0.0
    %94 = vmatpush1.msra.mxu0 %v63
    %95 = vmatprep.subr.mxu0 0.0
    %96 = vmatpush1.msra.mxu0 %v64
    %97 = vmatprep.subr.mxu0 0.0
    %98 = vmatpush1.msra.mxu0 %v65
    %99 = vmatprep.subr.mxu0 0.0
    %100 = vmatpush1.msra.mxu0 %v66
    %101 = vmatprep.subr.mxu0 0.0
    %102 = vmatpush1.msra.mxu0 %v67
    %103 = vmatprep.subr.mxu0 0.0
    %104 = vmatpush1.msra.mxu0 %v68
    %105 = vmatprep.subr.mxu0 0.0
    %106 = vmatpush1.msra.mxu0 %v69
    %107 = vmatprep.subr.mxu0 0.0
    %108 = vmatpush1.msra.mxu0 %v70
    %109 = vmatprep.subr.mxu0 0.0
    %110 = vmatpush1.msra.mxu0 %v71
    %111 = vmatprep.subr.mxu0 0.0
    %112 = vmatpush1.msra.mxu0 0.0
    %113 = vmatprep.subr.mxu0 0.0
    %114 = vmatpush1.msra.mxu0 0.0
    %115 = vmatprep.subr.mxu0 0.0
    %116 = vmatpush1.msra.mxu0 0.0
    %117 = vmatprep.subr.mxu0 0.0
    %118 = vmatpush1.msra.mxu0 0.0
    %119 = vmatprep.subr.mxu0 0.0
    %120 = vmatpush1.msra.mxu0 0.0
    %121 = vmatprep.subr.mxu0 0.0
    %122 = vmatpush1.msra.mxu0 0.0
    %123 = vmatprep.subr.mxu0 0.0
    %124 = vmatpush1.msra.mxu0 0.0
    %125 = vmatprep.subr.mxu0 0.0
    %126 = vmatpush1.msra.mxu0 0.0
    %127 = vmatprep.subr.mxu0 0.0
    %128 = vmatpush1.msra.mxu0 0.0
    %129 = vmatprep.subr.mxu0 0.0
    %130 = vmatpush1.msra.mxu0 0.0
    %131 = vmatprep.subr.mxu0 0.0
    %132 = vmatpush1.msra.mxu0 0.0
    %133 = vmatprep.subr.mxu0 0.0
    %134 = vmatpush1.msra.mxu0 0.0
    %135 = vmatprep.subr.mxu0 0.0
    %136 = vmatpush1.msra.mxu0 0.0
    %137 = vmatprep.subr.mxu0 0.0
    %138 = vmatpush1.msra.mxu0 0.0
    %139 = vmatprep.subr.mxu0 0.0
    %140 = vmatpush1.msra.mxu0 0.0
    %141 = vmatprep.subr.mxu0 0.0
    %142 = vmatpush1.msra.mxu0 0.0
    %143 = vmatprep.mubr.f32.mxu0 0.0
    %144 = vmatmul.mubr.f32.gmra.mrb[0].mxu0 %v54
    %v145 = vpop.f32.mrb[0].mxu0
    %v146 = vadd.f32 %v77, %v145
    %v147 = vpop.f32.mrb[0].mxu0
    %148 = vmatprep.mubr.f32.mxu0 0.0
    %149 = vmatmul.mubr.f32.gmra.mrb[0].mxu0 %v55
    %v150 = vpop.f32.mrb[0].mxu0
    %v151 = vadd.f32 %v77, %v150
    %v152 = vpop.f32.mrb[0].mxu0
    %153 = vdwg.mxu0
    %154 = vst [vmem:[#allocation8] sm:$0xff] %v146
    %155 = vst [vmem:[#allocation8 + $0x8] sm:$0xff] %v151
    // Predicated region
    $region26: #{tpu_custom_call.1} parent=1 // pred_check
      _
    $region27: #{tpu_custom_call.1} parent=1 // pred_check_branch
      %157 = sbr.rel (0) target = $region29
    $region28: #{tpu_custom_call.1} parent=1 // pred_region
      %s159 = ssub.s32 256, 256
      %160 = vsyncadd [#allocation4], %s159
      %s161 = sshll.u32 [#allocation8], 4
      %s162 = int_to_ptr.vmem [resolvable:$true] %s161
      %167 = dma.vmem_to_hbm [thread:$0]  %s162, 256, %s3, [#allocation4], 128, 128, 8
    $region29: #{tpu_custom_call.1} parent=1 // pred_fallthru
      _
    // Predicated region
    $region30: #{tpu_custom_call.1} parent=1 // pred_check
      _
    $region31: #{tpu_custom_call.1} parent=1 // pred_check_branch
      %169 = sbr.rel (0) target = $region33
    $region32: #{tpu_custom_call.1} parent=1 // pred_region
      %170 = dma.done [#allocation4], 256
    $region33: #{tpu_custom_call.1} parent=1 // pred_fallthru
      _
    %171 = vsyncpa [#allocation3], 1
    %172 = vsyncpa [#allocation6], 1
    %173 = vsyncpa [#allocation4], 1

</llo_original>
